<compile_context>
chip_gen: v7x
topology: tpu7x:2x2x1
jax: 0.10.0
libtpu: 0.0.40
codegen_flags: <defaults>
</compile_context>

<pallas_src>
import jax
import jax.numpy as jnp
from jax.experimental import pallas as pl
from jax.experimental.pallas import tpu as pltpu


def _sigmoid(x):
    # tanh form: a single EUP transcendental; mul/add go to the VALU.
    return 0.5 * jnp.tanh(0.5 * x) + 0.5


def _num_tensorcores():
    # v7x exposes 2 TensorCores per chip behind one device; give the "parallel"
    # grid axis at least that many steps.  Safe fallback = 1 (v5e/v6e).
    try:
        return max(1, int(getattr(jax.devices()[0], "num_cores", 1) or 1))
    except Exception:
        return 1


def odefunc_kernel(y_ref,            # (2,  TB)   state, feature-major (batch on lanes)
                   w1_ref, b1_ref,   # (128, 2)  f32, (128, 1) f32
                   w2_ref, b2_ref,   # (128,128) bf16, (128, 1) f32
                   w3_ref, b3_ref,   # (50, 128) bf16, (50, 1) f32
                   w4_ref, b4_ref,   # (2, 50)   f32,  (2, 1)  f32
                   o_ref):           # (2,  TB)
    y = y_ref[...]                                            # (2, TB) f32
    mm_dtype = w2_ref.dtype                                   # bf16 (or f32 override)

    # ---- Layer 1: K=2 contraction on the VPU (two FMAs), not the MXU.
    w1 = w1_ref[...]                                          # (128, 2)
    h1 = w1[:, 0:1] * y[0:1, :] + w1[:, 1:2] * y[1:2, :] + b1_ref[...]
    h1 = _sigmoid(h1)                                         # (128, TB) f32

    # ---- Layer 2: (128,128) @ (128,TB) on the MXU, bf16 operands, f32 accumulation.
    h2 = jnp.dot(w2_ref[...], h1.astype(mm_dtype),
                 preferred_element_type=jnp.float32) + b2_ref[...]
    h2 = _sigmoid(h2)                                         # (128, TB) f32

    # ---- Layer 3: (50,128) @ (128,TB) on the MXU.
    h3 = jnp.dot(w3_ref[...], h2.astype(mm_dtype),
                 preferred_element_type=jnp.float32) + b3_ref[...]
    h3 = _sigmoid(h3)                                         # (50, TB) f32

    # ---- Layer 4: tiny (2,50) @ (50,TB), kept f32 for accuracy -> lane-dense (2, TB).
    out = jnp.dot(w4_ref[...], h3, preferred_element_type=jnp.float32) + b4_ref[...]
    o_ref[...] = out.astype(o_ref.dtype)                      # (2, TB)


def odefunc_forward(t_batch, y, params, *, tile_b=256,
                    matmul_dtype=jnp.bfloat16, num_cores=None):
    """Pallas implementation of ODEFunc.forward. t_batch is ignored (as in PyTorch)."""
    del t_batch
    (w1, b1), (w2, b2), (w3, b3), (w4, b4) = params
    B = y.shape[0]

    if num_cores is None:
        num_cores = _num_tensorcores()

    # Tile = 128 * d, d a divisor of the number of 128-lane blocks -> no wasted tiles.
    n_blocks = -(-B // 128)
    max_d = max(1, min(tile_b // 128, n_blocks))
    if num_cores > 1 and n_blocks >= num_cores:
        max_d = min(max_d, n_blocks // num_cores)     # >= num_cores grid steps (v7x)
    d = next(c for c in range(max_d, 0, -1) if n_blocks % c == 0)
    tile = 128 * d
    grid = (n_blocks // d,)

    # Feature-major layout: batch on the 128-wide lane axis -> lane-dense output.
    # No explicit zero-padding: Pallas masks the partial last block.
    # TODO(synk): callers that keep the ODE state feature-major (2, B) end-to-end
    # can drop both transposes here.
    y_t = y.T                                                   # (2, B)

    # Cast the MXU weights to bf16 once in the wrapper (not per grid step).
    w2_mm = w2.astype(matmul_dtype)
    w3_mm = w3.astype(matmul_dtype)

    def full(arr):  # constant-index full-array block (no per-step re-DMA)
        return pl.BlockSpec(arr.shape, lambda i: (0,) * arr.ndim)

    out_t = pl.pallas_call(
        odefunc_kernel,
        out_shape=jax.ShapeDtypeStruct((2, B), jnp.float32),
        grid_spec=pltpu.PrefetchScalarGridSpec(
            num_scalar_prefetch=0,
            grid=grid,
            in_specs=[
                pl.BlockSpec((2, tile), lambda i: (0, i)),   # state tile (lane-dense)
                full(w1), full(b1),
                full(w2_mm), full(b2),
                full(w3_mm), full(b3),
                full(w4), full(b4),
            ],
            out_specs=pl.BlockSpec((2, tile), lambda i: (0, i)),
        ),
        compiler_params=pltpu.CompilerParams(
            dimension_semantics=("parallel",)),
    )(y_t, w1, b1, w2_mm, b2, w3_mm, b3, w4, b4)

    return out_t.T                                              # back to (B, 2)


def init_params(key):
    """Matches nn.init.normal_(std=0.1) weights, zero biases.
    Weights are stored PyTorch-style as (out, in); biases as (out, 1)."""
    dims = [(128, 2), (128, 128), (50, 128), (2, 50)]
    params = []
    for dout, din in dims:
        key, sub = jax.random.split(key)
        w = 0.1 * jax.random.normal(sub, (dout, din), dtype=jnp.float32)
        b = jnp.zeros((dout, 1), dtype=jnp.float32)
        params.append((w, b))
    return params


def odefunc_reference(y, params):
    (w1, b1), (w2, b2), (w3, b3), (w4, b4) = params
    h = jax.nn.sigmoid(y @ w1.T + b1.T)
    h = jax.nn.sigmoid(h @ w2.T + b2.T)
    h = jax.nn.sigmoid(h @ w3.T + b3.T)
    return h @ w4.T + b4.T


if __name__ == "__main__":
    root = jax.random.PRNGKey(0)
    k_params, k_y, k_t = jax.random.split(root, 3)

    params = init_params(k_params)

    B = 16
    y = jax.random.normal(k_y, (B, 2), dtype=jnp.float32)        # state: (batch, 2)
    t_batch = jax.random.uniform(k_t, (B,), dtype=jnp.float32)   # unused, as in PyTorch

    out = odefunc_forward(t_batch, y, params)
    out = jax.block_until_ready(out)

    ref = odefunc_reference(y, params)
    assert out.shape == (B, 2)
    # Tolerance accounts for bf16 MXU operands in layers 2-3 (f32 accumulation,
    # f32 layer 4); expected error is well under this bound.
    assert jnp.allclose(out, ref, atol=5e-3, rtol=5e-3), float(jnp.max(jnp.abs(out - ref)))

    print("KERNEL_OK")
</pallas_src>

<mosaic_0001>
module attributes {stable_mosaic.version = 11 : i64} {
  func.func @odefunc_kernel(%arg0: i32, %arg1: memref<2x128xf32, #tpu.memory_space<vmem>>, %arg2: memref<128x2xf32, #tpu.memory_space<vmem>>, %arg3: memref<128x1xf32, #tpu.memory_space<vmem>>, %arg4: memref<128x128xbf16, #tpu.memory_space<vmem>>, %arg5: memref<128x1xf32, #tpu.memory_space<vmem>>, %arg6: memref<50x128xbf16, #tpu.memory_space<vmem>>, %arg7: memref<50x1xf32, #tpu.memory_space<vmem>>, %arg8: memref<2x50xf32, #tpu.memory_space<vmem>>, %arg9: memref<2x1xf32, #tpu.memory_space<vmem>>, %arg10: memref<2x128xf32, #tpu.memory_space<vmem>>) attributes {dimension_semantics = [#tpu.dimension_semantics<parallel>], iteration_bounds = array<i64: 1>, scalar_prefetch = 0 : i64, scratch_operands = 0 : i64, tpu.core_type = #tpu.core_type<tc>, window_params = [{transform_indices = @transform_0, window_bounds = array<i64: 2, 128>}, {pipeline_mode = #tpu.pipeline_mode<synchronous>, transform_indices = @transform_1, window_bounds = array<i64: 128, 2>}, {pipeline_mode = #tpu.pipeline_mode<synchronous>, transform_indices = @transform_2, window_bounds = array<i64: 128, 1>}, {pipeline_mode = #tpu.pipeline_mode<synchronous>, transform_indices = @transform_3, window_bounds = array<i64: 128, 128>}, {pipeline_mode = #tpu.pipeline_mode<synchronous>, transform_indices = @transform_4, window_bounds = array<i64: 128, 1>}, {pipeline_mode = #tpu.pipeline_mode<synchronous>, transform_indices = @transform_5, window_bounds = array<i64: 50, 128>}, {pipeline_mode = #tpu.pipeline_mode<synchronous>, transform_indices = @transform_6, window_bounds = array<i64: 50, 1>}, {pipeline_mode = #tpu.pipeline_mode<synchronous>, transform_indices = @transform_7, window_bounds = array<i64: 2, 50>}, {pipeline_mode = #tpu.pipeline_mode<synchronous>, transform_indices = @transform_8, window_bounds = array<i64: 2, 1>}, {transform_indices = @transform_9, window_bounds = array<i64: 2, 128>}]} {
    %c0 = arith.constant 0 : index
    %c0_0 = arith.constant 0 : index
    %0 = vector.load %arg1[%c0, %c0_0] : memref<2x128xf32, #tpu.memory_space<vmem>>, vector<2x128xf32>
    %c0_1 = arith.constant 0 : index
    %c0_2 = arith.constant 0 : index
    %1 = vector.load %arg2[%c0_1, %c0_2] : memref<128x2xf32, #tpu.memory_space<vmem>>, vector<128x2xf32>
    %2 = vector.extract_strided_slice %1 {offsets = [0, 0], sizes = [128, 1], strides = [1, 1]} : vector<128x2xf32> to vector<128x1xf32>
    %3 = vector.extract_strided_slice %0 {offsets = [0, 0], sizes = [1, 128], strides = [1, 1]} : vector<2x128xf32> to vector<1x128xf32>
    %4 = vector.broadcast %2 : vector<128x1xf32> to vector<128x128xf32>
    %5 = vector.broadcast %3 : vector<1x128xf32> to vector<128x128xf32>
    %6 = arith.mulf %4, %5 : vector<128x128xf32>
    %7 = vector.extract_strided_slice %1 {offsets = [0, 1], sizes = [128, 1], strides = [1, 1]} : vector<128x2xf32> to vector<128x1xf32>
    %8 = vector.extract_strided_slice %0 {offsets = [1, 0], sizes = [1, 128], strides = [1, 1]} : vector<2x128xf32> to vector<1x128xf32>
    %9 = vector.broadcast %7 : vector<128x1xf32> to vector<128x128xf32>
    %10 = vector.broadcast %8 : vector<1x128xf32> to vector<128x128xf32>
    %11 = arith.mulf %9, %10 : vector<128x128xf32>
    %12 = arith.addf %6, %11 : vector<128x128xf32>
    %c0_3 = arith.constant 0 : index
    %c0_4 = arith.constant 0 : index
    %13 = vector.load %arg3[%c0_3, %c0_4] : memref<128x1xf32, #tpu.memory_space<vmem>>, vector<128x1xf32>
    %14 = vector.broadcast %13 : vector<128x1xf32> to vector<128x128xf32>
    %15 = arith.addf %12, %14 : vector<128x128xf32>
    %cst = arith.constant 5.000000e-01 : f32
    %16 = vector.broadcast %cst : f32 to vector<128x128xf32>
    %17 = arith.mulf %16, %15 : vector<128x128xf32>
    %18 = math.tanh %17 : vector<128x128xf32>
    %cst_5 = arith.constant 5.000000e-01 : f32
    %19 = vector.broadcast %cst_5 : f32 to vector<128x128xf32>
    %20 = arith.mulf %19, %18 : vector<128x128xf32>
    %cst_6 = arith.constant 5.000000e-01 : f32
    %21 = vector.broadcast %cst_6 : f32 to vector<128x128xf32>
    %22 = arith.addf %20, %21 : vector<128x128xf32>
    %c0_7 = arith.constant 0 : index
    %c0_8 = arith.constant 0 : index
    %23 = vector.load %arg4[%c0_7, %c0_8] : memref<128x128xbf16, #tpu.memory_space<vmem>>, vector<128x128xbf16>
    %24 = arith.truncf %22 : vector<128x128xf32> to vector<128x128xbf16>
    %cst_9 = arith.constant dense<0.000000e+00> : vector<128x128xf32>
    %25 = tpu.matmul %23, %24, %cst_9 {dimension_numbers = #tpu.dot_dimension_numbers<[1], [0], [0], [1], [0, 0, 1, 1], [], []>} : vector<128x128xbf16>, vector<128x128xbf16>, vector<128x128xf32> -> vector<128x128xf32>
    %c0_10 = arith.constant 0 : index
    %c0_11 = arith.constant 0 : index
    %26 = vector.load %arg5[%c0_10, %c0_11] : memref<128x1xf32, #tpu.memory_space<vmem>>, vector<128x1xf32>
    %27 = vector.broadcast %26 : vector<128x1xf32> to vector<128x128xf32>
    %28 = arith.addf %25, %27 : vector<128x128xf32>
    %cst_12 = arith.constant 5.000000e-01 : f32
    %29 = vector.broadcast %cst_12 : f32 to vector<128x128xf32>
    %30 = arith.mulf %29, %28 : vector<128x128xf32>
    %31 = math.tanh %30 : vector<128x128xf32>
    %cst_13 = arith.constant 5.000000e-01 : f32
    %32 = vector.broadcast %cst_13 : f32 to vector<128x128xf32>
    %33 = arith.mulf %32, %31 : vector<128x128xf32>
    %cst_14 = arith.constant 5.000000e-01 : f32
    %34 = vector.broadcast %cst_14 : f32 to vector<128x128xf32>
    %35 = arith.addf %33, %34 : vector<128x128xf32>
    %c0_15 = arith.constant 0 : index
    %c0_16 = arith.constant 0 : index
    %36 = vector.load %arg6[%c0_15, %c0_16] : memref<50x128xbf16, #tpu.memory_space<vmem>>, vector<50x128xbf16>
    %37 = arith.truncf %35 : vector<128x128xf32> to vector<128x128xbf16>
    %cst_17 = arith.constant dense<0.000000e+00> : vector<50x128xf32>
    %38 = tpu.matmul %36, %37, %cst_17 {dimension_numbers = #tpu.dot_dimension_numbers<[1], [0], [0], [1], [0, 0, 1, 1], [], []>} : vector<50x128xbf16>, vector<128x128xbf16>, vector<50x128xf32> -> vector<50x128xf32>
    %c0_18 = arith.constant 0 : index
    %c0_19 = arith.constant 0 : index
    %39 = vector.load %arg7[%c0_18, %c0_19] : memref<50x1xf32, #tpu.memory_space<vmem>>, vector<50x1xf32>
    %40 = vector.broadcast %39 : vector<50x1xf32> to vector<50x128xf32>
    %41 = arith.addf %38, %40 : vector<50x128xf32>
    %cst_20 = arith.constant 5.000000e-01 : f32
    %42 = vector.broadcast %cst_20 : f32 to vector<50x128xf32>
    %43 = arith.mulf %42, %41 : vector<50x128xf32>
    %44 = math.tanh %43 : vector<50x128xf32>
    %cst_21 = arith.constant 5.000000e-01 : f32
    %45 = vector.broadcast %cst_21 : f32 to vector<50x128xf32>
    %46 = arith.mulf %45, %44 : vector<50x128xf32>
    %cst_22 = arith.constant 5.000000e-01 : f32
    %47 = vector.broadcast %cst_22 : f32 to vector<50x128xf32>
    %48 = arith.addf %46, %47 : vector<50x128xf32>
    %c0_23 = arith.constant 0 : index
    %c0_24 = arith.constant 0 : index
    %49 = vector.load %arg8[%c0_23, %c0_24] : memref<2x50xf32, #tpu.memory_space<vmem>>, vector<2x50xf32>
    %cst_25 = arith.constant dense<0.000000e+00> : vector<2x128xf32>
    %50 = tpu.matmul %49, %48, %cst_25 {dimension_numbers = #tpu.dot_dimension_numbers<[1], [0], [0], [1], [0, 0, 1, 1], [], []>} : vector<2x50xf32>, vector<50x128xf32>, vector<2x128xf32> -> vector<2x128xf32>
    %c0_26 = arith.constant 0 : index
    %c0_27 = arith.constant 0 : index
    %51 = vector.load %arg9[%c0_26, %c0_27] : memref<2x1xf32, #tpu.memory_space<vmem>>, vector<2x1xf32>
    %52 = vector.broadcast %51 : vector<2x1xf32> to vector<2x128xf32>
    %53 = arith.addf %50, %52 : vector<2x128xf32>
    %c0_28 = arith.constant 0 : index
    %c0_29 = arith.constant 0 : index
    %54 = vector.load %arg10[%c0_28, %c0_29] : memref<2x128xf32, #tpu.memory_space<vmem>>, vector<2x128xf32>
    tpu.vector_store %arg10[%c0_28, %c0_29], %53 {strides = array<i32>} : memref<2x128xf32, #tpu.memory_space<vmem>>, vector<2x128xf32>,
    return
  }
  func.func @transform_0(%arg0: i32) -> (i32, i32) {
    %c0_i32 = arith.constant 0 : i32
    %c0_i32_0 = arith.constant 0 : i32
    return %c0_i32, %arg0 : i32, i32
  }
  func.func @transform_1(%arg0: i32) -> (i32, i32) {
    %c0_i32 = arith.constant 0 : i32
    %c0_i32_0 = arith.constant 0 : i32
    %c0_i32_1 = arith.constant 0 : i32
    return %c0_i32, %c0_i32_0 : i32, i32
  }
  func.func @transform_2(%arg0: i32) -> (i32, i32) {
    %c0_i32 = arith.constant 0 : i32
    %c0_i32_0 = arith.constant 0 : i32
    %c0_i32_1 = arith.constant 0 : i32
    return %c0_i32, %c0_i32_0 : i32, i32
  }
  func.func @transform_3(%arg0: i32) -> (i32, i32) {
    %c0_i32 = arith.constant 0 : i32
    %c0_i32_0 = arith.constant 0 : i32
    %c0_i32_1 = arith.constant 0 : i32
    return %c0_i32, %c0_i32_0 : i32, i32
  }
  func.func @transform_4(%arg0: i32) -> (i32, i32) {
    %c0_i32 = arith.constant 0 : i32
    %c0_i32_0 = arith.constant 0 : i32
    %c0_i32_1 = arith.constant 0 : i32
    return %c0_i32, %c0_i32_0 : i32, i32
  }
  func.func @transform_5(%arg0: i32) -> (i32, i32) {
    %c0_i32 = arith.constant 0 : i32
    %c0_i32_0 = arith.constant 0 : i32
    %c0_i32_1 = arith.constant 0 : i32
    return %c0_i32, %c0_i32_0 : i32, i32
  }
  func.func @transform_6(%arg0: i32) -> (i32, i32) {
    %c0_i32 = arith.constant 0 : i32
    %c0_i32_0 = arith.constant 0 : i32
    %c0_i32_1 = arith.constant 0 : i32
    return %c0_i32, %c0_i32_0 : i32, i32
  }
  func.func @transform_7(%arg0: i32) -> (i32, i32) {
    %c0_i32 = arith.constant 0 : i32
    %c0_i32_0 = arith.constant 0 : i32
    %c0_i32_1 = arith.constant 0 : i32
    return %c0_i32, %c0_i32_0 : i32, i32
  }
  func.func @transform_8(%arg0: i32) -> (i32, i32) {
    %c0_i32 = arith.constant 0 : i32
    %c0_i32_0 = arith.constant 0 : i32
    %c0_i32_1 = arith.constant 0 : i32
    return %c0_i32, %c0_i32_0 : i32, i32
  }
  func.func @transform_9(%arg0: i32) -> (i32, i32) {
    %c0_i32 = arith.constant 0 : i32
    %c0_i32_0 = arith.constant 0 : i32
    return %c0_i32, %arg0 : i32, i32
  }
}

</mosaic_0001>

<llo_original>
// kernel: tpu_custom_call.1
$region0: #{tpu_custom_call.1}
  #allocation0 [shape = 'u32[]', space=smem, size = 0x4, offset = 0x4, fixed_abs, tag = 'smem constant byte address 0x4 - core index']
  #allocation1 [shape = 'u32[144,128]{1,0:T(1,128)}', space=vmem, size = 0x12000, scoped, tag = 'internal scratch']
  %s0 = inlined_call_operand.vmem [shape: f32[2,16], index: 0, kind: input, shape index: {}]
  %s1 = inlined_call_operand.vmem [shape: f32[128,2], index: 1, kind: input, shape index: {}]
  %s2 = inlined_call_operand.vmem [shape: f32[128,1], index: 2, kind: input, shape index: {}]
  %s3 = inlined_call_operand.vmem [shape: bf16[128,128], index: 3, kind: input, shape index: {}]
  %s4 = inlined_call_operand.vmem [shape: f32[128,1], index: 4, kind: input, shape index: {}]
  %s5 = inlined_call_operand.vmem [shape: bf16[50,128], index: 5, kind: input, shape index: {}]
  %s6 = inlined_call_operand.vmem [shape: f32[50,1], index: 6, kind: input, shape index: {}]
  %s7 = inlined_call_operand.vmem [shape: f32[2,50], index: 7, kind: input, shape index: {}]
  %s8 = inlined_call_operand.vmem [shape: f32[2,1], index: 8, kind: input, shape index: {}]
  %s9 = inlined_call_operand.hbm [shape: f32[2,16], index: 9, kind: output, shape index: {}]
  %s10 = sld [smem:[#allocation0]]
  $region46: #{tpu_custom_call.1} parent=0
    _
  %s12 = ssub.s32 1, %s10
  %s13 = scalar_select 0, %s12, %s10
  $region1: #{tpu_custom_call.1} parent=0
    #allocation2 [shape = 'u8[1024]{0}', space=vmem, size = 0x400, scoped, tag = 'output window, operand 0, single buffered']
    #allocation3 [shape = 's32[1]{0}', space=sflag, size = 0x4, scoped, tag = 'scoped memory for tpu_custom_call.1']
    %14 = vsyncpa [#allocation3], 0
    // Predicated region
    $region2: #{tpu_custom_call.1} parent=1 // pred_check
      _
    $region3: #{tpu_custom_call.1} parent=1 // pred_check_branch
      %16 = sbr.rel (0) target = $region5
    $region4: #{tpu_custom_call.1} parent=1 // pred_region
      _
    $region5: #{tpu_custom_call.1} parent=1 // pred_fallthru
      _
    // Predicated region
    $region6: #{tpu_custom_call.1} parent=1 // pred_check
      _
    $region7: #{tpu_custom_call.1} parent=1 // pred_check_branch
      %18 = sbr.rel (0) target = $region9
    $region8: #{tpu_custom_call.1} parent=1 // pred_region
      _
    $region9: #{tpu_custom_call.1} parent=1 // pred_fallthru
      _
    // Predicated region
    $region10: #{tpu_custom_call.1} parent=1 // pred_check
      _
    $region11: #{tpu_custom_call.1} parent=1 // pred_check_branch
      %20 = sbr.rel (0) target = $region13
    $region12: #{tpu_custom_call.1} parent=1 // pred_region
      _
    $region13: #{tpu_custom_call.1} parent=1 // pred_fallthru
      _
    // Predicated region
    $region14: #{tpu_custom_call.1} parent=1 // pred_check
      _
    $region15: #{tpu_custom_call.1} parent=1 // pred_check_branch
      %22 = sbr.rel (0) target = $region17
    $region16: #{tpu_custom_call.1} parent=1 // pred_region
      _
    $region17: #{tpu_custom_call.1} parent=1 // pred_fallthru
      _
    // Predicated region
    $region18: #{tpu_custom_call.1} parent=1 // pred_check
      _
    $region19: #{tpu_custom_call.1} parent=1 // pred_check_branch
      %24 = sbr.rel (0) target = $region21
    $region20: #{tpu_custom_call.1} parent=1 // pred_region
      _
    $region21: #{tpu_custom_call.1} parent=1 // pred_fallthru
      _
    // Predicated region
    $region22: #{tpu_custom_call.1} parent=1 // pred_check
      _
    $region23: #{tpu_custom_call.1} parent=1 // pred_check_branch
      %26 = sbr.rel (0) target = $region25
    $region24: #{tpu_custom_call.1} parent=1 // pred_region
      _
    $region25: #{tpu_custom_call.1} parent=1 // pred_fallthru
      _
    // Predicated region
    $region26: #{tpu_custom_call.1} parent=1 // pred_check
      _
    $region27: #{tpu_custom_call.1} parent=1 // pred_check_branch
      %28 = sbr.rel (0) target = $region29
    $region28: #{tpu_custom_call.1} parent=1 // pred_region
      _
    $region29: #{tpu_custom_call.1} parent=1 // pred_fallthru
      _
    // Predicated region
    $region30: #{tpu_custom_call.1} parent=1 // pred_check
      _
    $region31: #{tpu_custom_call.1} parent=1 // pred_check_branch
      %30 = sbr.rel (0) target = $region33
    $region32: #{tpu_custom_call.1} parent=1 // pred_region
      _
    $region33: #{tpu_custom_call.1} parent=1 // pred_fallthru
      _
    // Predicated region
    $region34: #{tpu_custom_call.1} parent=1 // pred_check
      _
    $region35: #{tpu_custom_call.1} parent=1 // pred_check_branch
      %32 = sbr.rel (0) target = $region37
    $region36: #{tpu_custom_call.1} parent=1 // pred_region
      _
    $region37: #{tpu_custom_call.1} parent=1 // pred_fallthru
      _
    %v34 = vld [vmem:[%s0] sm:$0x3]
    %v35 = vld [vmem:[%s1] sm:$0xff]
    %v36 = vld [vmem:[%s1 + $0x8] sm:$0xff]
    %v37 = vld [vmem:[%s1 + $0x10] sm:$0xff]
    %v38 = vld [vmem:[%s1 + $0x18] sm:$0xff]
    %v39 = vld [vmem:[%s1 + $0x20] sm:$0xff]
    %v40 = vld [vmem:[%s1 + $0x28] sm:$0xff]
    %v41 = vld [vmem:[%s1 + $0x30] sm:$0xff]
    %v42 = vld [vmem:[%s1 + $0x38] sm:$0xff]
    %v43 = vld [vmem:[%s1 + $0x40] sm:$0xff]
    %v44 = vld [vmem:[%s1 + $0x48] sm:$0xff]
    %v45 = vld [vmem:[%s1 + $0x50] sm:$0xff]
    %v46 = vld [vmem:[%s1 + $0x58] sm:$0xff]
    %v47 = vld [vmem:[%s1 + $0x60] sm:$0xff]
    %v48 = vld [vmem:[%s1 + $0x68] sm:$0xff]
    %v49 = vld [vmem:[%s1 + $0x70] sm:$0xff]
    %v50 = vld [vmem:[%s1 + $0x78] sm:$0xff]
    %52 = vset.pattern.permute.xlu0 0
    %53 = vperm.xlu0 %52, %v35
    %v54 = vpop.permute.xlu0 %53
    %57 = vset.pattern.permute.xlu0 0
    %58 = vperm.xlu0 %57, %v36
    %v59 = vpop.permute.xlu0 %58
    %62 = vset.pattern.permute.xlu0 0
    %63 = vperm.xlu0 %62, %v37
    %v64 = vpop.permute.xlu0 %63
    %67 = vset.pattern.permute.xlu0 0
    %68 = vperm.xlu0 %67, %v38
    %v69 = vpop.permute.xlu0 %68
    %72 = vset.pattern.permute.xlu0 0
    %73 = vperm.xlu0 %72, %v39
    %v74 = vpop.permute.xlu0 %73
    %77 = vset.pattern.permute.xlu0 0
    %78 = vperm.xlu0 %77, %v40
    %v79 = vpop.permute.xlu0 %78
    %82 = vset.pattern.permute.xlu0 0
    %83 = vperm.xlu0 %82, %v41
    %v84 = vpop.permute.xlu0 %83
    %87 = vset.pattern.permute.xlu0 0
    %88 = vperm.xlu0 %87, %v42
    %v89 = vpop.permute.xlu0 %88
    %92 = vset.pattern.permute.xlu0 0
    %93 = vperm.xlu0 %92, %v43
    %v94 = vpop.permute.xlu0 %93
    %97 = vset.pattern.permute.xlu0 0
    %98 = vperm.xlu0 %97, %v44
    %v99 = vpop.permute.xlu0 %98
    %102 = vset.pattern.permute.xlu0 0
    %103 = vperm.xlu0 %102, %v45
    %v104 = vpop.permute.xlu0 %103
    %107 = vset.pattern.permute.xlu0 0
    %108 = vperm.xlu0 %107, %v46
    %v109 = vpop.permute.xlu0 %108
    %112 = vset.pattern.permute.xlu0 0
    %113 = vperm.xlu0 %112, %v47
    %v114 = vpop.permute.xlu0 %113
    %117 = vset.pattern.permute.xlu0 0
    %118 = vperm.xlu0 %117, %v48
    %v119 = vpop.permute.xlu0 %118
    %122 = vset.pattern.permute.xlu0 0
    %123 = vperm.xlu0 %122, %v49
    %v124 = vpop.permute.xlu0 %123
    %127 = vset.pattern.permute.xlu0 0
    %128 = vperm.xlu0 %127, %v50
    %v129 = vpop.permute.xlu0 %128
    %v131 = vlaneseq
    %v132 = vshrl.u32 %v131, 7
    %v133 = vsub.s32 0, %v132
    %v134 = vrot.slane %v34, %v133
    %v135 = vmul.f32 %v54, %v134
    %v136 = vmul.f32 %v59, %v134
    %v137 = vmul.f32 %v64, %v134
    %v138 = vmul.f32 %v69, %v134
    %v139 = vmul.f32 %v74, %v134
    %v140 = vmul.f32 %v79, %v134
    %v141 = vmul.f32 %v84, %v134
    %v142 = vmul.f32 %v89, %v134
    %v143 = vmul.f32 %v94, %v134
    %v144 = vmul.f32 %v99, %v134
    %v145 = vmul.f32 %v104, %v134
    %v146 = vmul.f32 %v109, %v134
    %v147 = vmul.f32 %v114, %v134
    %v148 = vmul.f32 %v119, %v134
    %v149 = vmul.f32 %v124, %v134
    %v150 = vmul.f32 %v129, %v134
    %151 = vset.pattern.permute.xlu0 1
    %152 = vperm.xlu0 %151, %v35
    %v153 = vpop.permute.xlu0 %152
    %155 = vset.pattern.permute.xlu0 1
    %156 = vperm.xlu0 %155, %v36
    %v157 = vpop.permute.xlu0 %156
    %159 = vset.pattern.permute.xlu0 1
    %160 = vperm.xlu0 %159, %v37
    %v161 = vpop.permute.xlu0 %160
    %163 = vset.pattern.permute.xlu0 1
    %164 = vperm.xlu0 %163, %v38
    %v165 = vpop.permute.xlu0 %164
    %167 = vset.pattern.permute.xlu0 1
    %168 = vperm.xlu0 %167, %v39
    %v169 = vpop.permute.xlu0 %168
    %171 = vset.pattern.permute.xlu0 1
    %172 = vperm.xlu0 %171, %v40
    %v173 = vpop.permute.xlu0 %172
    %175 = vset.pattern.permute.xlu0 1
    %176 = vperm.xlu0 %175, %v41
    %v177 = vpop.permute.xlu0 %176
    %179 = vset.pattern.permute.xlu0 1
    %180 = vperm.xlu0 %179, %v42
    %v181 = vpop.permute.xlu0 %180
    %183 = vset.pattern.permute.xlu0 1
    %184 = vperm.xlu0 %183, %v43
    %v185 = vpop.permute.xlu0 %184
    %187 = vset.pattern.permute.xlu0 1
    %188 = vperm.xlu0 %187, %v44
    %v189 = vpop.permute.xlu0 %188
    %191 = vset.pattern.permute.xlu0 1
    %192 = vperm.xlu0 %191, %v45
    %v193 = vpop.permute.xlu0 %192
    %195 = vset.pattern.permute.xlu0 1
    %196 = vperm.xlu0 %195, %v46
    %v197 = vpop.permute.xlu0 %196
    %199 = vset.pattern.permute.xlu0 1
    %200 = vperm.xlu0 %199, %v47
    %v201 = vpop.permute.xlu0 %200
    %203 = vset.pattern.permute.xlu0 1
    %204 = vperm.xlu0 %203, %v48
    %v205 = vpop.permute.xlu0 %204
    %207 = vset.pattern.permute.xlu0 1
    %208 = vperm.xlu0 %207, %v49
    %v209 = vpop.permute.xlu0 %208
    %211 = vset.pattern.permute.xlu0 1
    %212 = vperm.xlu0 %211, %v50
    %v213 = vpop.permute.xlu0 %212
    %v215 = vlaneseq
    %v216 = vshrl.u32 %v215, 7
    %v217 = vsub.s32 1, %v216
    %v218 = vrot.slane %v34, %v217
    %v219 = vmul.f32 %v153, %v218
    %v220 = vmul.f32 %v157, %v218
    %v221 = vmul.f32 %v161, %v218
    %v222 = vmul.f32 %v165, %v218
    %v223 = vmul.f32 %v169, %v218
    %v224 = vmul.f32 %v173, %v218
    %v225 = vmul.f32 %v177, %v218
    %v226 = vmul.f32 %v181, %v218
    %v227 = vmul.f32 %v185, %v218
    %v228 = vmul.f32 %v189, %v218
    %v229 = vmul.f32 %v193, %v218
    %v230 = vmul.f32 %v197, %v218
    %v231 = vmul.f32 %v201, %v218
    %v232 = vmul.f32 %v205, %v218
    %v233 = vmul.f32 %v209, %v218
    %v234 = vmul.f32 %v213, %v218
    %v235 = vadd.f32 %v135, %v219
    %v236 = vadd.f32 %v136, %v220
    %v237 = vadd.f32 %v137, %v221
    %v238 = vadd.f32 %v138, %v222
    %v239 = vadd.f32 %v139, %v223
    %v240 = vadd.f32 %v140, %v224
    %v241 = vadd.f32 %v141, %v225
    %v242 = vadd.f32 %v142, %v226
    %v243 = vadd.f32 %v143, %v227
    %v244 = vadd.f32 %v144, %v228
    %v245 = vadd.f32 %v145, %v229
    %v246 = vadd.f32 %v146, %v230
    %v247 = vadd.f32 %v147, %v231
    %v248 = vadd.f32 %v148, %v232
    %v249 = vadd.f32 %v149, %v233
    %v250 = vadd.f32 %v150, %v234
    %v251 = vld [vmem:[%s2] sm:$0xff]
    %v252 = vld [vmem:[%s2 + $0x8] sm:$0xff]
    %v253 = vld [vmem:[%s2 + $0x10] sm:$0xff]
    %v254 = vld [vmem:[%s2 + $0x18] sm:$0xff]
    %v255 = vld [vmem:[%s2 + $0x20] sm:$0xff]
    %v256 = vld [vmem:[%s2 + $0x28] sm:$0xff]
    %v257 = vld [vmem:[%s2 + $0x30] sm:$0xff]
    %v258 = vld [vmem:[%s2 + $0x38] sm:$0xff]
    %v259 = vld [vmem:[%s2 + $0x40] sm:$0xff]
    %v260 = vld [vmem:[%s2 + $0x48] sm:$0xff]
    %v261 = vld [vmem:[%s2 + $0x50] sm:$0xff]
    %v262 = vld [vmem:[%s2 + $0x58] sm:$0xff]
    %v263 = vld [vmem:[%s2 + $0x60] sm:$0xff]
    %v264 = vld [vmem:[%s2 + $0x68] sm:$0xff]
    %v265 = vld [vmem:[%s2 + $0x70] sm:$0xff]
    %v266 = vld [vmem:[%s2 + $0x78] sm:$0xff]
    %268 = vset.pattern.permute.xlu0 0
    %269 = vperm.xlu0 %268, %v251
    %v270 = vpop.permute.xlu0 %269
    %273 = vset.pattern.permute.xlu0 0
    %274 = vperm.xlu0 %273, %v252
    %v275 = vpop.permute.xlu0 %274
    %278 = vset.pattern.permute.xlu0 0
    %279 = vperm.xlu0 %278, %v253
    %v280 = vpop.permute.xlu0 %279
    %283 = vset.pattern.permute.xlu0 0
    %284 = vperm.xlu0 %283, %v254
    %v285 = vpop.permute.xlu0 %284
    %288 = vset.pattern.permute.xlu0 0
    %289 = vperm.xlu0 %288, %v255
    %v290 = vpop.permute.xlu0 %289
    %293 = vset.pattern.permute.xlu0 0
    %294 = vperm.xlu0 %293, %v256
    %v295 = vpop.permute.xlu0 %294
    %298 = vset.pattern.permute.xlu0 0
    %299 = vperm.xlu0 %298, %v257
    %v300 = vpop.permute.xlu0 %299
    %303 = vset.pattern.permute.xlu0 0
    %304 = vperm.xlu0 %303, %v258
    %v305 = vpop.permute.xlu0 %304
    %308 = vset.pattern.permute.xlu0 0
    %309 = vperm.xlu0 %308, %v259
    %v310 = vpop.permute.xlu0 %309
    %313 = vset.pattern.permute.xlu0 0
    %314 = vperm.xlu0 %313, %v260
    %v315 = vpop.permute.xlu0 %314
    %318 = vset.pattern.permute.xlu0 0
    %319 = vperm.xlu0 %318, %v261
    %v320 = vpop.permute.xlu0 %319
    %323 = vset.pattern.permute.xlu0 0
    %324 = vperm.xlu0 %323, %v262
    %v325 = vpop.permute.xlu0 %324
    %328 = vset.pattern.permute.xlu0 0
    %329 = vperm.xlu0 %328, %v263
    %v330 = vpop.permute.xlu0 %329
    %333 = vset.pattern.permute.xlu0 0
    %334 = vperm.xlu0 %333, %v264
    %v335 = vpop.permute.xlu0 %334
    %338 = vset.pattern.permute.xlu0 0
    %339 = vperm.xlu0 %338, %v265
    %v340 = vpop.permute.xlu0 %339
    %343 = vset.pattern.permute.xlu0 0
    %344 = vperm.xlu0 %343, %v266
    %v345 = vpop.permute.xlu0 %344
    %v347 = vadd.f32 %v235, %v270
    %v348 = vadd.f32 %v236, %v275
    %v349 = vadd.f32 %v237, %v280
    %v350 = vadd.f32 %v238, %v285
    %v351 = vadd.f32 %v239, %v290
    %v352 = vadd.f32 %v240, %v295
    %v353 = vadd.f32 %v241, %v300
    %v354 = vadd.f32 %v242, %v305
    %v355 = vadd.f32 %v243, %v310
    %v356 = vadd.f32 %v244, %v315
    %v357 = vadd.f32 %v245, %v320
    %v358 = vadd.f32 %v246, %v325
    %v359 = vadd.f32 %v247, %v330
    %v360 = vadd.f32 %v248, %v335
    %v361 = vadd.f32 %v249, %v340
    %v362 = vadd.f32 %v250, %v345
    %v363 = vmul.f32 %v347, 0.5
    %v364 = vmul.f32 %v348, 0.5
    %v365 = vmul.f32 %v349, 0.5
    %v366 = vmul.f32 %v350, 0.5
    %v367 = vmul.f32 %v351, 0.5
    %v368 = vmul.f32 %v352, 0.5
    %v369 = vmul.f32 %v353, 0.5
    %v370 = vmul.f32 %v354, 0.5
    %v371 = vmul.f32 %v355, 0.5
    %v372 = vmul.f32 %v356, 0.5
    %v373 = vmul.f32 %v357, 0.5
    %v374 = vmul.f32 %v358, 0.5
    %v375 = vmul.f32 %v359, 0.5
    %v376 = vmul.f32 %v360, 0.5
    %v377 = vmul.f32 %v361, 0.5
    %v378 = vmul.f32 %v362, 0.5
    %v379 = vtanh.pop %v363
    %v380 = vtanh.pop %v364
    %v381 = vtanh.pop %v365
    %v382 = vtanh.pop %v366
    %v383 = vtanh.pop %v367
    %v384 = vtanh.pop %v368
    %v385 = vtanh.pop %v369
    %v386 = vtanh.pop %v370
    %v387 = vtanh.pop %v371
    %v388 = vtanh.pop %v372
    %v389 = vtanh.pop %v373
    %v390 = vtanh.pop %v374
    %v391 = vtanh.pop %v375
    %v392 = vtanh.pop %v376
    %v393 = vtanh.pop %v377
    %v394 = vtanh.pop %v378
    %v395 = vmul.f32 %v379, 0.5
    %v396 = vmul.f32 %v380, 0.5
    %v397 = vmul.f32 %v381, 0.5
    %v398 = vmul.f32 %v382, 0.5
    %v399 = vmul.f32 %v383, 0.5
    %v400 = vmul.f32 %v384, 0.5
    %v401 = vmul.f32 %v385, 0.5
    %v402 = vmul.f32 %v386, 0.5
    %v403 = vmul.f32 %v387, 0.5
    %v404 = vmul.f32 %v388, 0.5
    %v405 = vmul.f32 %v389, 0.5
    %v406 = vmul.f32 %v390, 0.5
    %v407 = vmul.f32 %v391, 0.5
    %v408 = vmul.f32 %v392, 0.5
    %v409 = vmul.f32 %v393, 0.5
    %v410 = vmul.f32 %v394, 0.5
    %v411 = vadd.f32 %v395, 0.5
    %v412 = vadd.f32 %v396, 0.5
    %v413 = vadd.f32 %v397, 0.5
    %v414 = vadd.f32 %v398, 0.5
    %v415 = vadd.f32 %v399, 0.5
    %v416 = vadd.f32 %v400, 0.5
    %v417 = vadd.f32 %v401, 0.5
    %v418 = vadd.f32 %v402, 0.5
    %v419 = vadd.f32 %v403, 0.5
    %v420 = vadd.f32 %v404, 0.5
    %v421 = vadd.f32 %v405, 0.5
    %v422 = vadd.f32 %v406, 0.5
    %v423 = vadd.f32 %v407, 0.5
    %v424 = vadd.f32 %v408, 0.5
    %v425 = vadd.f32 %v409, 0.5
    %v426 = vadd.f32 %v410, 0.5
    %v427 = vld [vmem:[%s3] sm:$0xf]
    %v428 = vld [vmem:[%s3 + $0x4] sm:$0xf]
    %v429 = vld [vmem:[%s3 + $0x8] sm:$0xf]
    %v430 = vld [vmem:[%s3 + $0xc] sm:$0xf]
    %v431 = vld [vmem:[%s3 + $0x10] sm:$0xf]
    %v432 = vld [vmem:[%s3 + $0x14] sm:$0xf]
    %v433 = vld [vmem:[%s3 + $0x18] sm:$0xf]
    %v434 = vld [vmem:[%s3 + $0x1c] sm:$0xf]
    %v435 = vld [vmem:[%s3 + $0x20] sm:$0xf]
    %v436 = vld [vmem:[%s3 + $0x24] sm:$0xf]
    %v437 = vld [vmem:[%s3 + $0x28] sm:$0xf]
    %v438 = vld [vmem:[%s3 + $0x2c] sm:$0xf]
    %v439 = vld [vmem:[%s3 + $0x30] sm:$0xf]
    %v440 = vld [vmem:[%s3 + $0x34] sm:$0xf]
    %v441 = vld [vmem:[%s3 + $0x38] sm:$0xf]
    %v442 = vld [vmem:[%s3 + $0x3c] sm:$0xf]
    %v443 = vpack.c.bf16 %v412, %v411
    %v444 = vpack.c.bf16 %v414, %v413
    %v445 = vpack.c.bf16 %v416, %v415
    %v446 = vpack.c.bf16 %v418, %v417
    %v447 = vpack.c.bf16 %v420, %v419
    %v448 = vpack.c.bf16 %v422, %v421
    %v449 = vpack.c.bf16 %v424, %v423
    %v450 = vpack.c.bf16 %v426, %v425
    %v451 = vld [vmem:[%s4] sm:$0xff]
    %v452 = vld [vmem:[%s4 + $0x8] sm:$0xff]
    %v453 = vld [vmem:[%s4 + $0x10] sm:$0xff]
    %v454 = vld [vmem:[%s4 + $0x18] sm:$0xff]
    %v455 = vld [vmem:[%s4 + $0x20] sm:$0xff]
    %v456 = vld [vmem:[%s4 + $0x28] sm:$0xff]
    %v457 = vld [vmem:[%s4 + $0x30] sm:$0xff]
    %v458 = vld [vmem:[%s4 + $0x38] sm:$0xff]
    %v459 = vld [vmem:[%s4 + $0x40] sm:$0xff]
    %v460 = vld [vmem:[%s4 + $0x48] sm:$0xff]
    %v461 = vld [vmem:[%s4 + $0x50] sm:$0xff]
    %v462 = vld [vmem:[%s4 + $0x58] sm:$0xff]
    %v463 = vld [vmem:[%s4 + $0x60] sm:$0xff]
    %v464 = vld [vmem:[%s4 + $0x68] sm:$0xff]
    %v465 = vld [vmem:[%s4 + $0x70] sm:$0xff]
    %v466 = vld [vmem:[%s4 + $0x78] sm:$0xff]
    %468 = vset.pattern.permute.xlu0 0
    %469 = vperm.xlu0 %468, %v451
    %v470 = vpop.permute.xlu0 %469
    %473 = vset.pattern.permute.xlu0 0
    %474 = vperm.xlu0 %473, %v452
    %v475 = vpop.permute.xlu0 %474
    %478 = vset.pattern.permute.xlu0 0
    %479 = vperm.xlu0 %478, %v453
    %v480 = vpop.permute.xlu0 %479
    %483 = vset.pattern.permute.xlu0 0
    %484 = vperm.xlu0 %483, %v454
    %v485 = vpop.permute.xlu0 %484
    %488 = vset.pattern.permute.xlu0 0
    %489 = vperm.xlu0 %488, %v455
    %v490 = vpop.permute.xlu0 %489
    %493 = vset.pattern.permute.xlu0 0
    %494 = vperm.xlu0 %493, %v456
    %v495 = vpop.permute.xlu0 %494
    %498 = vset.pattern.permute.xlu0 0
    %499 = vperm.xlu0 %498, %v457
    %v500 = vpop.permute.xlu0 %499
    %503 = vset.pattern.permute.xlu0 0
    %504 = vperm.xlu0 %503, %v458
    %v505 = vpop.permute.xlu0 %504
    %508 = vset.pattern.permute.xlu0 0
    %509 = vperm.xlu0 %508, %v459
    %v510 = vpop.permute.xlu0 %509
    %513 = vset.pattern.permute.xlu0 0
    %514 = vperm.xlu0 %513, %v460
    %v515 = vpop.permute.xlu0 %514
    %518 = vset.pattern.permute.xlu0 0
    %519 = vperm.xlu0 %518, %v461
    %v520 = vpop.permute.xlu0 %519
    %523 = vset.pattern.permute.xlu0 0
    %524 = vperm.xlu0 %523, %v462
    %v525 = vpop.permute.xlu0 %524
    %528 = vset.pattern.permute.xlu0 0
    %529 = vperm.xlu0 %528, %v463
    %v530 = vpop.permute.xlu0 %529
    %533 = vset.pattern.permute.xlu0 0
    %534 = vperm.xlu0 %533, %v464
    %v535 = vpop.permute.xlu0 %534
    %538 = vset.pattern.permute.xlu0 0
    %539 = vperm.xlu0 %538, %v465
    %v540 = vpop.permute.xlu0 %539
    %543 = vset.pattern.permute.xlu0 0
    %544 = vperm.xlu0 %543, %v466
    %v545 = vpop.permute.xlu0 %544
    %v563 = vunpack.c.l.b16 %v427
    %v564 = vunpack.c.l.b16 %v428
    %v565 = vunpack.c.l.b16 %v429
    %v566 = vunpack.c.l.b16 %v430
    %v567 = vunpack.c.l.b16 %v431
    %v568 = vunpack.c.l.b16 %v432
    %v569 = vunpack.c.l.b16 %v433
    %v570 = vunpack.c.l.b16 %v434
    %v571 = vunpack.c.l.b16 %v435
    %v572 = vunpack.c.l.b16 %v436
    %v573 = vunpack.c.l.b16 %v437
    %v574 = vunpack.c.l.b16 %v438
    %v575 = vunpack.c.l.b16 %v439
    %v576 = vunpack.c.l.b16 %v440
    %v577 = vunpack.c.l.b16 %v441
    %v578 = vunpack.c.l.b16 %v442
    %v579 = vpack.c.b16 %v564, %v563
    %v580 = vpack.c.b16 %v566, %v565
    %v581 = vpack.c.b16 %v568, %v567
    %v582 = vpack.c.b16 %v570, %v569
    %v583 = vpack.c.b16 %v572, %v571
    %v584 = vpack.c.b16 %v574, %v573
    %v585 = vpack.c.b16 %v576, %v575
    %v586 = vpack.c.b16 %v578, %v577
    %595 = vmatprep.subr.bf16.mxu0 0
    %596 = vmatpush1.bf16.msra.mxu0 %v443
    %597 = vmatprep.subr.bf16.mxu0 0
    %598 = vmatpush1.bf16.msra.mxu0 %v444
    %599 = vmatprep.subr.bf16.mxu0 0
    %600 = vmatpush1.bf16.msra.mxu0 %v445
    %601 = vmatprep.subr.bf16.mxu0 0
    %602 = vmatpush1.bf16.msra.mxu0 %v446
    %603 = vmatprep.subr.bf16.mxu0 0
    %604 = vmatpush1.bf16.msra.mxu0 %v447
    %605 = vmatprep.subr.bf16.mxu0 0
    %606 = vmatpush1.bf16.msra.mxu0 %v448
    %607 = vmatprep.subr.bf16.mxu0 0
    %608 = vmatpush1.bf16.msra.mxu0 %v449
    %609 = vmatprep.subr.bf16.mxu0 0
    %610 = vmatpush1.bf16.msra.mxu0 %v450
    %611 = vmatprep.subr.bf16.mxu0 0
    %612 = vmatpush1.bf16.msra.mxu0 0
    %613 = vmatprep.subr.bf16.mxu0 0
    %614 = vmatpush1.bf16.msra.mxu0 0
    %615 = vmatprep.subr.bf16.mxu0 0
    %616 = vmatpush1.bf16.msra.mxu0 0
    %617 = vmatprep.subr.bf16.mxu0 0
    %618 = vmatpush1.bf16.msra.mxu0 0
    %619 = vmatprep.subr.bf16.mxu0 0
    %620 = vmatpush1.bf16.msra.mxu0 0
    %621 = vmatprep.subr.bf16.mxu0 0
    %622 = vmatpush1.bf16.msra.mxu0 0
    %623 = vmatprep.subr.bf16.mxu0 0
    %624 = vmatpush1.bf16.msra.mxu0 0
    %625 = vmatprep.subr.bf16.mxu0 0
    %626 = vmatpush1.bf16.msra.mxu0 0
    %627 = vmatprep.mubr.bf16.mxu0 0
    %628 = vmatmul.mubr.bf16.gmra.mrb[0].mxu0 %v579
    %v629 = vpop.f32.mrb[0].mxu0
    %v630 = vadd.f32 %v470, %v629
    %v631 = vpop.f32.mrb[0].mxu0
    %v632 = vpop.f32.mrb[0].mxu0
    %v633 = vadd.f32 %v475, %v632
    %v634 = vpop.f32.mrb[0].mxu0
    %635 = vmatprep.mubr.bf16.mxu0 0
    %636 = vmatmul.mubr.bf16.gmra.mrb[0].mxu0 %v580
    %v637 = vpop.f32.mrb[0].mxu0
    %v638 = vadd.f32 %v480, %v637
    %v639 = vpop.f32.mrb[0].mxu0
    %v640 = vpop.f32.mrb[0].mxu0
    %v641 = vadd.f32 %v485, %v640
    %v642 = vpop.f32.mrb[0].mxu0
    %643 = vmatprep.mubr.bf16.mxu0 0
    %644 = vmatmul.mubr.bf16.gmra.mrb[0].mxu0 %v581
    %v645 = vpop.f32.mrb[0].mxu0
    %v646 = vadd.f32 %v490, %v645
    %v647 = vpop.f32.mrb[0].mxu0
    %v648 = vpop.f32.mrb[0].mxu0
    %v649 = vadd.f32 %v495, %v648
    %v650 = vpop.f32.mrb[0].mxu0
    %651 = vmatprep.mubr.bf16.mxu0 0
    %652 = vmatmul.mubr.bf16.gmra.mrb[0].mxu0 %v582
    %v653 = vpop.f32.mrb[0].mxu0
    %v654 = vadd.f32 %v500, %v653
    %v655 = vpop.f32.mrb[0].mxu0
    %v656 = vpop.f32.mrb[0].mxu0
    %v657 = vadd.f32 %v505, %v656
    %v658 = vpop.f32.mrb[0].mxu0
    %659 = vmatprep.mubr.bf16.mxu0 0
    %660 = vmatmul.mubr.bf16.gmra.mrb[0].mxu0 %v583
    %v661 = vpop.f32.mrb[0].mxu0
    %v662 = vadd.f32 %v510, %v661
    %v663 = vpop.f32.mrb[0].mxu0
    %v664 = vpop.f32.mrb[0].mxu0
    %v665 = vadd.f32 %v515, %v664
    %v666 = vpop.f32.mrb[0].mxu0
    %667 = vmatprep.mubr.bf16.mxu0 0
    %668 = vmatmul.mubr.bf16.gmra.mrb[0].mxu0 %v584
    %v669 = vpop.f32.mrb[0].mxu0
    %v670 = vadd.f32 %v520, %v669
    %v671 = vpop.f32.mrb[0].mxu0
    %v672 = vpop.f32.mrb[0].mxu0
    %v673 = vadd.f32 %v525, %v672
    %v674 = vpop.f32.mrb[0].mxu0
    %675 = vmatprep.mubr.bf16.mxu0 0
    %676 = vmatmul.mubr.bf16.gmra.mrb[0].mxu0 %v585
    %v677 = vpop.f32.mrb[0].mxu0
    %v678 = vadd.f32 %v530, %v677
    %v679 = vpop.f32.mrb[0].mxu0
    %v680 = vpop.f32.mrb[0].mxu0
    %v681 = vadd.f32 %v535, %v680
    %v682 = vpop.f32.mrb[0].mxu0
    %683 = vmatprep.mubr.bf16.mxu0 0
    %684 = vmatmul.mubr.bf16.gmra.mrb[0].mxu0 %v586
    %v685 = vpop.f32.mrb[0].mxu0
    %v686 = vadd.f32 %v540, %v685
    %v687 = vpop.f32.mrb[0].mxu0
    %v688 = vpop.f32.mrb[0].mxu0
    %v689 = vadd.f32 %v545, %v688
    %v690 = vpop.f32.mrb[0].mxu0
    %691 = vdwg.mxu0
    %v692 = vmul.f32 %v630, 0.5
    %v693 = vmul.f32 %v633, 0.5
    %v694 = vmul.f32 %v638, 0.5
    %v695 = vmul.f32 %v641, 0.5
    %v696 = vmul.f32 %v646, 0.5
    %v697 = vmul.f32 %v649, 0.5
    %v698 = vmul.f32 %v654, 0.5
    %v699 = vmul.f32 %v657, 0.5
    %v700 = vmul.f32 %v662, 0.5
    %v701 = vmul.f32 %v665, 0.5
    %v702 = vmul.f32 %v670, 0.5
    %v703 = vmul.f32 %v673, 0.5
    %v704 = vmul.f32 %v678, 0.5
    %v705 = vmul.f32 %v681, 0.5
    %v706 = vmul.f32 %v686, 0.5
    %v707 = vmul.f32 %v689, 0.5
    %v708 = vtanh.pop %v692
    %v709 = vtanh.pop %v693
    %v710 = vtanh.pop %v694
    %v711 = vtanh.pop %v695
    %v712 = vtanh.pop %v696
    %v713 = vtanh.pop %v697
    %v714 = vtanh.pop %v698
    %v715 = vtanh.pop %v699
    %v716 = vtanh.pop %v700
    %v717 = vtanh.pop %v701
    %v718 = vtanh.pop %v702
    %v719 = vtanh.pop %v703
    %v720 = vtanh.pop %v704
    %v721 = vtanh.pop %v705
    %v722 = vtanh.pop %v706
    %v723 = vtanh.pop %v707
    %v724 = vmul.f32 %v708, 0.5
    %v725 = vmul.f32 %v709, 0.5
    %v726 = vmul.f32 %v710, 0.5
    %v727 = vmul.f32 %v711, 0.5
    %v728 = vmul.f32 %v712, 0.5
    %v729 = vmul.f32 %v713, 0.5
    %v730 = vmul.f32 %v714, 0.5
    %v731 = vmul.f32 %v715, 0.5
    %v732 = vmul.f32 %v716, 0.5
    %v733 = vmul.f32 %v717, 0.5
    %v734 = vmul.f32 %v718, 0.5
    %v735 = vmul.f32 %v719, 0.5
    %v736 = vmul.f32 %v720, 0.5
    %v737 = vmul.f32 %v721, 0.5
    %v738 = vmul.f32 %v722, 0.5
    %v739 = vmul.f32 %v723, 0.5
    %v740 = vadd.f32 %v724, 0.5
    %v741 = vadd.f32 %v725, 0.5
    %v742 = vadd.f32 %v726, 0.5
    %v743 = vadd.f32 %v727, 0.5
    %v744 = vadd.f32 %v728, 0.5
    %v745 = vadd.f32 %v729, 0.5
    %v746 = vadd.f32 %v730, 0.5
    %v747 = vadd.f32 %v731, 0.5
    %v748 = vadd.f32 %v732, 0.5
    %v749 = vadd.f32 %v733, 0.5
    %v750 = vadd.f32 %v734, 0.5
    %v751 = vadd.f32 %v735, 0.5
    %v752 = vadd.f32 %v736, 0.5
    %v753 = vadd.f32 %v737, 0.5
    %v754 = vadd.f32 %v738, 0.5
    %v755 = vadd.f32 %v739, 0.5
    %v756 = vld [vmem:[%s5] sm:$0xf]
    %v757 = vld [vmem:[%s5 + $0x4] sm:$0xf]
    %v758 = vld [vmem:[%s5 + $0x8] sm:$0xf]
    %v759 = vld [vmem:[%s5 + $0xc] sm:$0xf]
    %v760 = vld [vmem:[%s5 + $0x10] sm:$0xf]
    %v761 = vld [vmem:[%s5 + $0x14] sm:$0xf]
    %v762 = vld [vmem:[%s5 + $0x18] sm:$0x1]
    %v763 = vpack.c.bf16 %v741, %v740
    %v764 = vpack.c.bf16 %v743, %v742
    %v765 = vpack.c.bf16 %v745, %v744
    %v766 = vpack.c.bf16 %v747, %v746
    %v767 = vpack.c.bf16 %v749, %v748
    %v768 = vpack.c.bf16 %v751, %v750
    %v769 = vpack.c.bf16 %v753, %v752
    %v770 = vpack.c.bf16 %v755, %v754
    %v771 = vld [vmem:[%s6] sm:$0xff]
    %v772 = vld [vmem:[%s6 + $0x8] sm:$0xff]
    %v773 = vld [vmem:[%s6 + $0x10] sm:$0xff]
    %v774 = vld [vmem:[%s6 + $0x18] sm:$0xff]
    %v775 = vld [vmem:[%s6 + $0x20] sm:$0xff]
    %v776 = vld [vmem:[%s6 + $0x28] sm:$0xff]
    %v777 = vld [vmem:[%s6 + $0x30] sm:$0x3]
    %779 = vset.pattern.permute.xlu0 0
    %780 = vperm.xlu0 %779, %v771
    %v781 = vpop.permute.xlu0 %780
    %784 = vset.pattern.permute.xlu0 0
    %785 = vperm.xlu0 %784, %v772
    %v786 = vpop.permute.xlu0 %785
    %789 = vset.pattern.permute.xlu0 0
    %790 = vperm.xlu0 %789, %v773
    %v791 = vpop.permute.xlu0 %790
    %794 = vset.pattern.permute.xlu0 0
    %795 = vperm.xlu0 %794, %v774
    %v796 = vpop.permute.xlu0 %795
    %799 = vset.pattern.permute.xlu0 0
    %800 = vperm.xlu0 %799, %v775
    %v801 = vpop.permute.xlu0 %800
    %804 = vset.pattern.permute.xlu0 0
    %805 = vperm.xlu0 %804, %v776
    %v806 = vpop.permute.xlu0 %805
    %809 = vset.pattern.permute.xlu0 0
    %810 = vperm.xlu0 %809, %v777
    %v811 = vpop.permute.xlu0 %810
    %v820 = vunpack.c.l.b16 %v756
    %v821 = vunpack.c.l.b16 %v757
    %v822 = vunpack.c.l.b16 %v758
    %v823 = vunpack.c.l.b16 %v759
    %v824 = vunpack.c.l.b16 %v760
    %v825 = vunpack.c.l.b16 %v761
    %v826 = vunpack.c.l.b16 %v762
    %v827 = vpack.c.b16 %v821, %v820
    %v828 = vpack.c.b16 %v823, %v822
    %v829 = vpack.c.b16 %v825, %v824
    %v830 = vpack.c.b16 %v826, %v826
    %835 = vmatprep.subr.bf16.mxu0 0
    %836 = vmatpush1.bf16.msra.mxu0 %v763
    %837 = vmatprep.subr.bf16.mxu0 0
    %838 = vmatpush1.bf16.msra.mxu0 %v764
    %839 = vmatprep.subr.bf16.mxu0 0
    %840 = vmatpush1.bf16.msra.mxu0 %v765
    %841 = vmatprep.subr.bf16.mxu0 0
    %842 = vmatpush1.bf16.msra.mxu0 %v766
    %843 = vmatprep.subr.bf16.mxu0 0
    %844 = vmatpush1.bf16.msra.mxu0 %v767
    %845 = vmatprep.subr.bf16.mxu0 0
    %846 = vmatpush1.bf16.msra.mxu0 %v768
    %847 = vmatprep.subr.bf16.mxu0 0
    %848 = vmatpush1.bf16.msra.mxu0 %v769
    %849 = vmatprep.subr.bf16.mxu0 0
    %850 = vmatpush1.bf16.msra.mxu0 %v770
    %851 = vmatprep.subr.bf16.mxu0 0
    %852 = vmatpush1.bf16.msra.mxu0 0
    %853 = vmatprep.subr.bf16.mxu0 0
    %854 = vmatpush1.bf16.msra.mxu0 0
    %855 = vmatprep.subr.bf16.mxu0 0
    %856 = vmatpush1.bf16.msra.mxu0 0
    %857 = vmatprep.subr.bf16.mxu0 0
    %858 = vmatpush1.bf16.msra.mxu0 0
    %859 = vmatprep.subr.bf16.mxu0 0
    %860 = vmatpush1.bf16.msra.mxu0 0
    %861 = vmatprep.subr.bf16.mxu0 0
    %862 = vmatpush1.bf16.msra.mxu0 0
    %863 = vmatprep.subr.bf16.mxu0 0
    %864 = vmatpush1.bf16.msra.mxu0 0
    %865 = vmatprep.subr.bf16.mxu0 0
    %866 = vmatpush1.bf16.msra.mxu0 0
    %867 = vmatprep.mubr.bf16.mxu0 0
    %868 = vmatmul.mubr.bf16.gmra.mrb[0].mxu0 %v827
    %v869 = vpop.f32.mrb[0].mxu0
    %v870 = vadd.f32 %v781, %v869
    %v871 = vpop.f32.mrb[0].mxu0
    %v872 = vpop.f32.mrb[0].mxu0
    %v873 = vadd.f32 %v786, %v872
    %v874 = vpop.f32.mrb[0].mxu0
    %875 = vmatprep.mubr.bf16.mxu0 0
    %876 = vmatmul.mubr.bf16.gmra.mrb[0].mxu0 %v828
    %v877 = vpop.f32.mrb[0].mxu0
    %v878 = vadd.f32 %v791, %v877
    %v879 = vpop.f32.mrb[0].mxu0
    %v880 = vpop.f32.mrb[0].mxu0
    %v881 = vadd.f32 %v796, %v880
    %v882 = vpop.f32.mrb[0].mxu0
    %883 = vmatprep.mubr.bf16.mxu0 0
    %884 = vmatmul.mubr.bf16.gmra.mrb[0].mxu0 %v829
    %v885 = vpop.f32.mrb[0].mxu0
    %v886 = vadd.f32 %v801, %v885
    %v887 = vpop.f32.mrb[0].mxu0
    %v888 = vpop.f32.mrb[0].mxu0
    %v889 = vadd.f32 %v806, %v888
    %v890 = vpop.f32.mrb[0].mxu0
    %891 = vmatprep.mubr.bf16.mxu0 0
    %892 = vmatmul.mubr.bf16.gmra.mrb[0].mxu0 %v830
    %v893 = vpop.f32.mrb[0].mxu0
    %v894 = vadd.f32 %v811, %v893
    %v895 = vpop.f32.mrb[0].mxu0
    %v896 = vpop.f32.mrb[0].mxu0
    %v897 = vpop.f32.mrb[0].mxu0
    %898 = vdwg.mxu0
    %v899 = vmul.f32 %v870, 0.5
    %v900 = vmul.f32 %v873, 0.5
    %v901 = vmul.f32 %v878, 0.5
    %v902 = vmul.f32 %v881, 0.5
    %v903 = vmul.f32 %v886, 0.5
    %v904 = vmul.f32 %v889, 0.5
    %v905 = vmul.f32 %v894, 0.5
    %v906 = vtanh.pop %v899
    %v907 = vtanh.pop %v900
    %v908 = vtanh.pop %v901
    %v909 = vtanh.pop %v902
    %v910 = vtanh.pop %v903
    %v911 = vtanh.pop %v904
    %v912 = vtanh.pop %v905
    %v913 = vmul.f32 %v906, 0.5
    %v914 = vmul.f32 %v907, 0.5
    %v915 = vmul.f32 %v908, 0.5
    %v916 = vmul.f32 %v909, 0.5
    %v917 = vmul.f32 %v910, 0.5
    %v918 = vmul.f32 %v911, 0.5
    %v919 = vmul.f32 %v912, 0.5
    %v920 = vadd.f32 %v913, 0.5
    %v921 = vadd.f32 %v914, 0.5
    %v922 = vadd.f32 %v915, 0.5
    %v923 = vadd.f32 %v916, 0.5
    %v924 = vadd.f32 %v917, 0.5
    %v925 = vadd.f32 %v918, 0.5
    %v926 = vadd.f32 %v919, 0.5
    %v927 = vld [vmem:[%s7] sm:$0x3]
    %v928 = vld [vmem:[%s8] sm:$0x3]
    %930 = vset.pattern.permute.xlu0 0
    %931 = vperm.xlu0 %930, %v928
    %v932 = vpop.permute.xlu0 %931
    %vm934 = vcmask 408576
    %v936 = vsel %vm934, %v927, 0
    %vm938 = vcmask 1041408
    %v940 = vsel %vm938, %v926, 0
    %942 = vmatprep.subr.mxu0 0.0
    %943 = vmatpush1.msra.mxu0 %v920
    %944 = vmatprep.subr.mxu0 0.0
    %945 = vmatpush1.msra.mxu0 %v921
    %946 = vmatprep.subr.mxu0 0.0
    %947 = vmatpush1.msra.mxu0 %v922
    %948 = vmatprep.subr.mxu0 0.0
    %949 = vmatpush1.msra.mxu0 %v923
    %950 = vmatprep.subr.mxu0 0.0
    %951 = vmatpush1.msra.mxu0 %v924
    %952 = vmatprep.subr.mxu0 0.0
    %953 = vmatpush1.msra.mxu0 %v925
    %954 = vmatprep.subr.mxu0 0.0
    %955 = vmatpush1.msra.mxu0 %v940
    %956 = vmatprep.subr.mxu0 0.0
    %957 = vmatpush1.msra.mxu0 0.0
    %958 = vmatprep.subr.mxu0 0.0
    %959 = vmatpush1.msra.mxu0 0.0
    %960 = vmatprep.subr.mxu0 0.0
    %961 = vmatpush1.msra.mxu0 0.0
    %962 = vmatprep.subr.mxu0 0.0
    %963 = vmatpush1.msra.mxu0 0.0
    %964 = vmatprep.subr.mxu0 0.0
    %965 = vmatpush1.msra.mxu0 0.0
    %966 = vmatprep.subr.mxu0 0.0
    %967 = vmatpush1.msra.mxu0 0.0
    %968 = vmatprep.subr.mxu0 0.0
    %969 = vmatpush1.msra.mxu0 0.0
    %970 = vmatprep.subr.mxu0 0.0
    %971 = vmatpush1.msra.mxu0 0.0
    %972 = vmatprep.subr.mxu0 0.0
    %973 = vmatpush1.msra.mxu0 0.0
    %974 = vmatprep.subr.mxu0 0.0
    %975 = vmatpush1.msra.mxu0 0.0
    %976 = vmatprep.subr.mxu0 0.0
    %977 = vmatpush1.msra.mxu0 0.0
    %978 = vmatprep.subr.mxu0 0.0
    %979 = vmatpush1.msra.mxu0 0.0
    %980 = vmatprep.subr.mxu0 0.0
    %981 = vmatpush1.msra.mxu0 0.0
    %982 = vmatprep.subr.mxu0 0.0
    %983 = vmatpush1.msra.mxu0 0.0
    %984 = vmatprep.subr.mxu0 0.0
    %985 = vmatpush1.msra.mxu0 0.0
    %986 = vmatprep.subr.mxu0 0.0
    %987 = vmatpush1.msra.mxu0 0.0
    %988 = vmatprep.subr.mxu0 0.0
    %989 = vmatpush1.msra.mxu0 0.0
    %990 = vmatprep.subr.mxu0 0.0
    %991 = vmatpush1.msra.mxu0 0.0
    %992 = vmatprep.subr.mxu0 0.0
    %993 = vmatpush1.msra.mxu0 0.0
    %994 = vmatprep.subr.mxu0 0.0
    %995 = vmatpush1.msra.mxu0 0.0
    %996 = vmatprep.subr.mxu0 0.0
    %997 = vmatpush1.msra.mxu0 0.0
    %998 = vmatprep.subr.mxu0 0.0
    %999 = vmatpush1.msra.mxu0 0.0
    %1000 = vmatprep.subr.mxu0 0.0
    %1001 = vmatpush1.msra.mxu0 0.0
    %1002 = vmatprep.subr.mxu0 0.0
    %1003 = vmatpush1.msra.mxu0 0.0
    %1004 = vmatprep.subr.mxu0 0.0
    %1005 = vmatpush1.msra.mxu0 0.0
    %1006 = vmatprep.mubr.f32.mxu0 0.0
    %1007 = vmatmul.mubr.f32.gmra.mrb[0].mxu0 %v936
    %v1008 = vpop.f32.mrb[0].mxu0
    %v1009 = vadd.f32 %v932, %v1008
    %v1010 = vpop.f32.mrb[0].mxu0
    %1011 = vdwg.mxu0
    %1012 = vst [vmem:[#allocation2] sm:$0x3] %v1009
    // Predicated region
    $region38: #{tpu_custom_call.1} parent=1 // pred_check
      _
    $region39: #{tpu_custom_call.1} parent=1 // pred_check_branch
      %1014 = sbr.rel (0) target = $region41
    $region40: #{tpu_custom_call.1} parent=1 // pred_region
      %s1016 = ssub.s32 32, 32
      %1017 = vsyncadd [#allocation3], %s1016
      %s1019 = sshll.u32 [#allocation2], 4
      %s1020 = int_to_ptr.vmem [resolvable:$true] %s1019
      %1022 = dma.vmem_to_hbm [thread:$0]  %s1020, 32, %s9, [#allocation3]
    $region41: #{tpu_custom_call.1} parent=1 // pred_fallthru
      _
    // Predicated region
    $region42: #{tpu_custom_call.1} parent=1 // pred_check
      _
    $region43: #{tpu_custom_call.1} parent=1 // pred_check_branch
      %1024 = sbr.rel (0) target = $region45
    $region44: #{tpu_custom_call.1} parent=1 // pred_region
      %1025 = dma.done [#allocation3], 32
    $region45: #{tpu_custom_call.1} parent=1 // pred_fallthru
      _
    %1026 = vsyncpa [#allocation3], 1

</llo_original>
